<compile_context>
chip_gen: v7x
topology: tpu7x:2x2x1
jax: 0.10.0
libtpu: 0.0.40
codegen_flags: <defaults>
</compile_context>

<pallas_src>
import functools

import jax
import jax.numpy as jnp
from jax.experimental import pallas as pl
from jax.experimental.pallas import tpu as pltpu


# ---------------------------------------------------------------------------
# Pallas kernel: `Bt` batch elements per grid step, everything lane-padded.
# ---------------------------------------------------------------------------
def _mp_kernel(x_ref, a_ref,
               wm_ref, bm_ref,
               wih_ref, bih_ref,
               whh_ref, bhh_ref,
               o_ref, *, n_layers, d_pad):
    Bt, N, Dp = x_ref.shape
    x = x_ref[...].reshape(Bt * N, Dp)            # f32, (Bt*N, Dp)

    # ----- message embedding: n_layers x (Linear + ReLU) ------------------
    # Weights arrive pre-transposed as (in, out): y = m @ W + b (no .T here).
    m = x
    for l in range(n_layers):                     # static unroll
        m = jnp.maximum(
            jnp.dot(m, wm_ref[l], preferred_element_type=jnp.float32)
            + bm_ref[l], 0.0)

    # ----- aggregate + activation: msg = ReLU(A @ m) ----------------------
    # A streamed as bf16 (halves HBM bytes); bf16 x bf16 -> f32 on the MXU.
    m3 = m.reshape(Bt, N, Dp).astype(jnp.bfloat16)
    msg = jnp.maximum(
        jnp.einsum("bij,bjd->bid", a_ref[...], m3,
                   preferred_element_type=jnp.float32), 0.0)
    msg = msg.reshape(Bt * N, Dp)

    # ----- GRUCell vertex update: h' = GRU(input=msg, hidden=x) -----------
    # Fused gates: one (Dp, 3Dp) matmul per side, column blocks = [r | z | n].
    gi = jnp.dot(msg, wih_ref[...], preferred_element_type=jnp.float32) + bih_ref[...]
    gh = jnp.dot(x,   whh_ref[...], preferred_element_type=jnp.float32) + bhh_ref[...]

    r = jax.nn.sigmoid(gi[:, :d_pad]          + gh[:, :d_pad])
    z = jax.nn.sigmoid(gi[:, d_pad:2 * d_pad] + gh[:, d_pad:2 * d_pad])
    n = jnp.tanh(gi[:, 2 * d_pad:] + r * gh[:, 2 * d_pad:])
    h_new = (1.0 - z) * n + z * x

    o_ref[...] = h_new.reshape(Bt, N, Dp).astype(o_ref.dtype)


# ---------------------------------------------------------------------------
# Wrapper: padding, weight fusion/transposition, batch tiling (plain JAX glue).
# ---------------------------------------------------------------------------
def _round_up(v, m):
    return ((v + m - 1) // m) * m


def _auto_batch_tile(B, N, d_pad):
    # Per-batch-element block bytes: A (bf16) + x (f32) + out (f32).
    per_b = N * N * 2 + 2 * N * d_pad * 4
    cap = max(1, (4 << 20) // max(per_b, 1))      # ~4 MiB of block per grid step
    if B > 1:
        cap = min(cap, B // 2)                    # keep >= 2 grid steps (v7x 2 TCs)
    bt = 1
    for d in range(1, min(B, cap) + 1):
        if B % d == 0:
            bt = d
    return bt


def _fuse_gate_weights(w, b, hidden, d_pad):
    # w: (3, D, D) in PyTorch (out, in) layout; b: (3, 1, D).
    w_t = jnp.swapaxes(w, 1, 2)                                        # (3, in, out)
    w_p = jnp.zeros((3, d_pad, d_pad), jnp.float32).at[:, :hidden, :hidden].set(w_t)
    w_all = jnp.concatenate([w_p[0], w_p[1], w_p[2]], axis=1)          # (Dp, 3Dp): [r|z|n]
    b_p = jnp.zeros((3, 1, d_pad), jnp.float32).at[:, :, :hidden].set(b)
    b_all = b_p.reshape(1, 3 * d_pad)                                  # (1, 3Dp)
    return w_all, b_all


def message_passing_layer(h, A, params, batch_tile=None):
    B, N, hidden = h.shape
    assert A.shape == (B, N, N)
    d_pad = _round_up(hidden, 128)                 # lane-dense channel dim

    # --- inputs ------------------------------------------------------------
    x_p = jnp.pad(h, ((0, 0), (0, 0), (0, d_pad - hidden)))            # f32 (B, N, Dp)
    A_bf = A.astype(jnp.bfloat16)                                       # stream A as bf16

    # --- parameters: pre-transpose, zero-pad, fuse GRU gates ---------------
    wm, bm = params["wm"], params["bm"]            # (L, D, D) PyTorch (out,in), (L, 1, D)
    L = wm.shape[0]
    wm_t = jnp.swapaxes(wm, 1, 2)                                      # (L, in, out)
    wm_p = jnp.zeros((L, d_pad, d_pad), jnp.float32).at[:, :hidden, :hidden].set(wm_t)
    bm_p = jnp.zeros((L, 1, d_pad), jnp.float32).at[:, :, :hidden].set(bm)

    wih_all, bih_all = _fuse_gate_weights(params["wih"], params["bih"], hidden, d_pad)
    whh_all, bhh_all = _fuse_gate_weights(params["whh"], params["bhh"], hidden, d_pad)

    # --- grid / tiling ------------------------------------------------------
    Bt = batch_tile if batch_tile is not None else _auto_batch_tile(B, N, d_pad)
    assert B % Bt == 0
    grid = (B // Bt,)

    kernel = functools.partial(_mp_kernel, n_layers=L, d_pad=d_pad)

    out = pl.pallas_call(
        kernel,
        out_shape=jax.ShapeDtypeStruct((B, N, d_pad), jnp.float32),
        grid=grid,
        in_specs=[
            pl.BlockSpec((Bt, N, d_pad), lambda b: (b, 0, 0)),          # x (padded)
            pl.BlockSpec((Bt, N, N), lambda b: (b, 0, 0)),              # A (bf16)
            # Constant index maps -> weights stay VMEM-resident across steps.
            pl.BlockSpec((L, d_pad, d_pad), lambda b: (0, 0, 0)),       # message W (pre-T)
            pl.BlockSpec((L, 1, d_pad), lambda b: (0, 0, 0)),           # message b
            pl.BlockSpec((d_pad, 3 * d_pad), lambda b: (0, 0)),         # GRU W_ih fused
            pl.BlockSpec((1, 3 * d_pad), lambda b: (0, 0)),             # GRU b_ih fused
            pl.BlockSpec((d_pad, 3 * d_pad), lambda b: (0, 0)),         # GRU W_hh fused
            pl.BlockSpec((1, 3 * d_pad), lambda b: (0, 0)),             # GRU b_hh fused
        ],
        out_specs=pl.BlockSpec((Bt, N, d_pad), lambda b: (b, 0, 0)),
        compiler_params=pltpu.CompilerParams(
            dimension_semantics=("parallel",)),
    )(x_p, A_bf, wm_p, bm_p, wih_all, bih_all, whh_all, bhh_all)

    return out[:, :, :hidden]                      # drop padded lanes


# ---------------------------------------------------------------------------
# Pure-JAX reference (mirrors the PyTorch forward, full f32) for verification.
# ---------------------------------------------------------------------------
def _reference(h, A, params):
    m = h
    for l in range(params["wm"].shape[0]):
        m = jax.nn.relu(jnp.einsum("bnd,ed->bne", m, params["wm"][l]) + params["bm"][l])
    msg = jax.nn.relu(jnp.einsum("bnm,bmd->bnd", A, m))

    def gate(i):
        gi = jnp.einsum("bnd,ed->bne", msg, params["wih"][i]) + params["bih"][i]
        gh = jnp.einsum("bnd,ed->bne", h,   params["whh"][i]) + params["bhh"][i]
        return gi, gh

    gi_r, gh_r = gate(0)
    gi_z, gh_z = gate(1)
    gi_n, gh_n = gate(2)
    r = jax.nn.sigmoid(gi_r + gh_r)
    z = jax.nn.sigmoid(gi_z + gh_z)
    n = jnp.tanh(gi_n + r * gh_n)
    return (1.0 - z) * n + z * h


# ---------------------------------------------------------------------------
def _init_params(key, hidden, n_message_layers):
    ks = jax.random.split(key, 6)
    scale = 0.2
    return {
        "wm":  scale * jax.random.normal(ks[0], (n_message_layers, hidden, hidden), jnp.float32),
        "bm":  scale * jax.random.normal(ks[1], (n_message_layers, 1, hidden), jnp.float32),
        "wih": scale * jax.random.normal(ks[2], (3, hidden, hidden), jnp.float32),
        "bih": scale * jax.random.normal(ks[3], (3, 1, hidden), jnp.float32),
        "whh": scale * jax.random.normal(ks[4], (3, hidden, hidden), jnp.float32),
        "bhh": scale * jax.random.normal(ks[5], (3, 1, hidden), jnp.float32),
    }


if __name__ == "__main__":
    B, N, hidden = 2, 8, 32
    n_message_layers = 2

    key = jax.random.PRNGKey(0)
    k_h, k_a, k_p = jax.random.split(key, 3)

    h = jax.random.normal(k_h, (B, N, hidden), jnp.float32)
    A = jax.nn.softmax(jax.random.normal(k_a, (B, N, N), jnp.float32), axis=-1)
    params = _init_params(k_p, hidden, n_message_layers)

    h_out = message_passing_layer(h, A, params)
    jax.block_until_ready(h_out)

    h_ref = _reference(h, A, params)
    assert h_out.shape == (B, N, hidden)
    # Tolerance accounts for the bf16 quantization of A / MLP output feeding the
    # MXU aggregate matmul (accumulation is f32); everything else is exact f32.
    err = float(jnp.max(jnp.abs(h_out - h_ref)))
    assert jnp.allclose(h_out, h_ref, atol=2e-2, rtol=2e-2), f"max abs err {err}"

    print("KERNEL_OK")
</pallas_src>

<mosaic_0001>
module attributes {stable_mosaic.version = 11 : i64} {
  func.func @_mp_kernel(%arg0: i32, %arg1: memref<1x8x128xf32, #tpu.memory_space<vmem>>, %arg2: memref<1x8x8xbf16, #tpu.memory_space<vmem>>, %arg3: memref<2x128x128xf32, #tpu.memory_space<vmem>>, %arg4: memref<2x1x128xf32, #tpu.memory_space<vmem>>, %arg5: memref<128x384xf32, #tpu.memory_space<vmem>>, %arg6: memref<1x384xf32, #tpu.memory_space<vmem>>, %arg7: memref<128x384xf32, #tpu.memory_space<vmem>>, %arg8: memref<1x384xf32, #tpu.memory_space<vmem>>, %arg9: memref<1x8x128xf32, #tpu.memory_space<vmem>>) attributes {dimension_semantics = [#tpu.dimension_semantics<parallel>], iteration_bounds = array<i64: 2>, scalar_prefetch = 0 : i64, scratch_operands = 0 : i64, tpu.core_type = #tpu.core_type<tc>, window_params = [{transform_indices = @transform_0, window_bounds = array<i64: 1, 8, 128>}, {transform_indices = @transform_1, window_bounds = array<i64: 1, 8, 8>}, {pipeline_mode = #tpu.pipeline_mode<synchronous>, transform_indices = @transform_2, window_bounds = array<i64: 2, 128, 128>}, {pipeline_mode = #tpu.pipeline_mode<synchronous>, transform_indices = @transform_3, window_bounds = array<i64: 2, 1, 128>}, {pipeline_mode = #tpu.pipeline_mode<synchronous>, transform_indices = @transform_4, window_bounds = array<i64: 128, 384>}, {pipeline_mode = #tpu.pipeline_mode<synchronous>, transform_indices = @transform_5, window_bounds = array<i64: 1, 384>}, {pipeline_mode = #tpu.pipeline_mode<synchronous>, transform_indices = @transform_6, window_bounds = array<i64: 128, 384>}, {pipeline_mode = #tpu.pipeline_mode<synchronous>, transform_indices = @transform_7, window_bounds = array<i64: 1, 384>}, {transform_indices = @transform_8, window_bounds = array<i64: 1, 8, 128>}]} {
    %c0 = arith.constant 0 : index
    %c0_0 = arith.constant 0 : index
    %c0_1 = arith.constant 0 : index
    %0 = vector.load %arg1[%c0, %c0_0, %c0_1] : memref<1x8x128xf32, #tpu.memory_space<vmem>>, vector<1x8x128xf32>
    %1 = vector.shape_cast %0 : vector<1x8x128xf32> to vector<8x128xf32>
    %c0_2 = arith.constant 0 : index
    %c0_3 = arith.constant 0 : index
    %c0_4 = arith.constant 0 : index
    %2 = vector.load %arg3[%c0_2, %c0_3, %c0_4] : memref<2x128x128xf32, #tpu.memory_space<vmem>>, vector<1x128x128xf32>
    %3 = vector.shape_cast %2 : vector<1x128x128xf32> to vector<128x128xf32>
    %cst = arith.constant dense<0.000000e+00> : vector<8x128xf32>
    %4 = tpu.matmul %1, %3, %cst {dimension_numbers = #tpu.dot_dimension_numbers<[1], [0], [0], [1], [0, 0, 1, 1], [], []>} : vector<8x128xf32>, vector<128x128xf32>, vector<8x128xf32> -> vector<8x128xf32>
    %c0_5 = arith.constant 0 : index
    %c0_6 = arith.constant 0 : index
    %c0_7 = arith.constant 0 : index
    %5 = vector.load %arg4[%c0_5, %c0_6, %c0_7] : memref<2x1x128xf32, #tpu.memory_space<vmem>>, vector<1x1x128xf32>
    %6 = vector.shape_cast %5 : vector<1x1x128xf32> to vector<1x128xf32>
    %7 = vector.broadcast %6 : vector<1x128xf32> to vector<8x128xf32>
    %8 = arith.addf %4, %7 : vector<8x128xf32>
    %cst_8 = arith.constant 0.000000e+00 : f32
    %9 = vector.broadcast %cst_8 : f32 to vector<8x128xf32>
    %10 = arith.maximumf %8, %9 : vector<8x128xf32>
    %c1 = arith.constant 1 : index
    %c0_9 = arith.constant 0 : index
    %c0_10 = arith.constant 0 : index
    %11 = vector.load %arg3[%c1, %c0_9, %c0_10] : memref<2x128x128xf32, #tpu.memory_space<vmem>>, vector<1x128x128xf32>
    %12 = vector.shape_cast %11 : vector<1x128x128xf32> to vector<128x128xf32>
    %cst_11 = arith.constant dense<0.000000e+00> : vector<8x128xf32>
    %13 = tpu.matmul %10, %12, %cst_11 {dimension_numbers = #tpu.dot_dimension_numbers<[1], [0], [0], [1], [0, 0, 1, 1], [], []>} : vector<8x128xf32>, vector<128x128xf32>, vector<8x128xf32> -> vector<8x128xf32>
    %c1_12 = arith.constant 1 : index
    %c0_13 = arith.constant 0 : index
    %c0_14 = arith.constant 0 : index
    %14 = vector.load %arg4[%c1_12, %c0_13, %c0_14] : memref<2x1x128xf32, #tpu.memory_space<vmem>>, vector<1x1x128xf32>
    %15 = vector.shape_cast %14 : vector<1x1x128xf32> to vector<1x128xf32>
    %16 = vector.broadcast %15 : vector<1x128xf32> to vector<8x128xf32>
    %17 = arith.addf %13, %16 : vector<8x128xf32>
    %cst_15 = arith.constant 0.000000e+00 : f32
    %18 = vector.broadcast %cst_15 : f32 to vector<8x128xf32>
    %19 = arith.maximumf %17, %18 : vector<8x128xf32>
    %20 = vector.shape_cast %19 : vector<8x128xf32> to vector<1x8x128xf32>
    %21 = arith.truncf %20 : vector<1x8x128xf32> to vector<1x8x128xbf16>
    %c0_16 = arith.constant 0 : index
    %c0_17 = arith.constant 0 : index
    %c0_18 = arith.constant 0 : index
    %22 = vector.load %arg2[%c0_16, %c0_17, %c0_18] : memref<1x8x8xbf16, #tpu.memory_space<vmem>>, vector<1x8x8xbf16>
    "tpu.trace_start"() <{level = 10 : i32, message = "bij,bjd->bid"}> : () -> ()
    %cst_19 = arith.constant dense<0.000000e+00> : vector<1x8x128xf32>
    %23 = tpu.matmul %22, %21, %cst_19 {dimension_numbers = #tpu.dot_dimension_numbers<[2], [1], [1], [2], [0, 0, 0, 1, 1, 2], [0], [0]>} : vector<1x8x8xbf16>, vector<1x8x128xbf16>, vector<1x8x128xf32> -> vector<1x8x128xf32>
    "tpu.trace_stop"() : () -> ()
    %cst_20 = arith.constant 0.000000e+00 : f32
    %24 = vector.broadcast %cst_20 : f32 to vector<1x8x128xf32>
    %25 = arith.maximumf %23, %24 : vector<1x8x128xf32>
    %26 = vector.shape_cast %25 : vector<1x8x128xf32> to vector<8x128xf32>
    %c0_21 = arith.constant 0 : index
    %c0_22 = arith.constant 0 : index
    %27 = vector.load %arg5[%c0_21, %c0_22] : memref<128x384xf32, #tpu.memory_space<vmem>>, vector<128x384xf32>
    %cst_23 = arith.constant dense<0.000000e+00> : vector<8x384xf32>
    %28 = tpu.matmul %26, %27, %cst_23 {dimension_numbers = #tpu.dot_dimension_numbers<[1], [0], [0], [1], [0, 0, 1, 1], [], []>} : vector<8x128xf32>, vector<128x384xf32>, vector<8x384xf32> -> vector<8x384xf32>
    %c0_24 = arith.constant 0 : index
    %c0_25 = arith.constant 0 : index
    %29 = vector.load %arg6[%c0_24, %c0_25] : memref<1x384xf32, #tpu.memory_space<vmem>>, vector<1x384xf32>
    %30 = vector.broadcast %29 : vector<1x384xf32> to vector<8x384xf32>
    %31 = arith.addf %28, %30 : vector<8x384xf32>
    %c0_26 = arith.constant 0 : index
    %c0_27 = arith.constant 0 : index
    %32 = vector.load %arg7[%c0_26, %c0_27] : memref<128x384xf32, #tpu.memory_space<vmem>>, vector<128x384xf32>
    %cst_28 = arith.constant dense<0.000000e+00> : vector<8x384xf32>
    %33 = tpu.matmul %1, %32, %cst_28 {dimension_numbers = #tpu.dot_dimension_numbers<[1], [0], [0], [1], [0, 0, 1, 1], [], []>} : vector<8x128xf32>, vector<128x384xf32>, vector<8x384xf32> -> vector<8x384xf32>
    %c0_29 = arith.constant 0 : index
    %c0_30 = arith.constant 0 : index
    %34 = vector.load %arg8[%c0_29, %c0_30] : memref<1x384xf32, #tpu.memory_space<vmem>>, vector<1x384xf32>
    %35 = vector.broadcast %34 : vector<1x384xf32> to vector<8x384xf32>
    %36 = arith.addf %33, %35 : vector<8x384xf32>
    %37 = vector.extract_strided_slice %31 {offsets = [0, 0], sizes = [8, 128], strides = [1, 1]} : vector<8x384xf32> to vector<8x128xf32>
    %38 = vector.extract_strided_slice %36 {offsets = [0, 0], sizes = [8, 128], strides = [1, 1]} : vector<8x384xf32> to vector<8x128xf32>
    %39 = arith.addf %37, %38 : vector<8x128xf32>
    %40 = arith.negf %39 : vector<8x128xf32>
    %41 = math.exp %40 : vector<8x128xf32>
    %cst_31 = arith.constant 1.000000e+00 : f32
    %42 = vector.broadcast %cst_31 : f32 to vector<8x128xf32>
    %43 = arith.addf %42, %41 : vector<8x128xf32>
    %44 = arith.divf %42, %43 : vector<8x128xf32>
    %45 = vector.extract_strided_slice %31 {offsets = [0, 128], sizes = [8, 128], strides = [1, 1]} : vector<8x384xf32> to vector<8x128xf32>
    %46 = vector.extract_strided_slice %36 {offsets = [0, 128], sizes = [8, 128], strides = [1, 1]} : vector<8x384xf32> to vector<8x128xf32>
    %47 = arith.addf %45, %46 : vector<8x128xf32>
    %48 = arith.negf %47 : vector<8x128xf32>
    %49 = math.exp %48 : vector<8x128xf32>
    %cst_32 = arith.constant 1.000000e+00 : f32
    %50 = vector.broadcast %cst_32 : f32 to vector<8x128xf32>
    %51 = arith.addf %50, %49 : vector<8x128xf32>
    %52 = arith.divf %50, %51 : vector<8x128xf32>
    %53 = vector.extract_strided_slice %31 {offsets = [0, 256], sizes = [8, 128], strides = [1, 1]} : vector<8x384xf32> to vector<8x128xf32>
    %54 = vector.extract_strided_slice %36 {offsets = [0, 256], sizes = [8, 128], strides = [1, 1]} : vector<8x384xf32> to vector<8x128xf32>
    %55 = arith.mulf %44, %54 : vector<8x128xf32>
    %56 = arith.addf %53, %55 : vector<8x128xf32>
    %57 = math.tanh %56 : vector<8x128xf32>
    %cst_33 = arith.constant 1.000000e+00 : f32
    %58 = vector.broadcast %cst_33 : f32 to vector<8x128xf32>
    %59 = arith.subf %58, %52 : vector<8x128xf32>
    %60 = arith.mulf %59, %57 : vector<8x128xf32>
    %61 = arith.mulf %52, %1 : vector<8x128xf32>
    %62 = arith.addf %60, %61 : vector<8x128xf32>
    %63 = vector.shape_cast %62 : vector<8x128xf32> to vector<1x8x128xf32>
    %c0_34 = arith.constant 0 : index
    %c0_35 = arith.constant 0 : index
    %c0_36 = arith.constant 0 : index
    %64 = vector.load %arg9[%c0_34, %c0_35, %c0_36] : memref<1x8x128xf32, #tpu.memory_space<vmem>>, vector<1x8x128xf32>
    tpu.vector_store %arg9[%c0_34, %c0_35, %c0_36], %63 {strides = array<i32>} : memref<1x8x128xf32, #tpu.memory_space<vmem>>, vector<1x8x128xf32>,
    return
  }
  func.func @transform_0(%arg0: i32) -> (i32, i32, i32) {
    %c0_i32 = arith.constant 0 : i32
    %c0_i32_0 = arith.constant 0 : i32
    %c0_i32_1 = arith.constant 0 : i32
    return %arg0, %c0_i32, %c0_i32_0 : i32, i32, i32
  }
  func.func @transform_1(%arg0: i32) -> (i32, i32, i32) {
    %c0_i32 = arith.constant 0 : i32
    %c0_i32_0 = arith.constant 0 : i32
    %c0_i32_1 = arith.constant 0 : i32
    return %arg0, %c0_i32, %c0_i32_0 : i32, i32, i32
  }
  func.func @transform_2(%arg0: i32) -> (i32, i32, i32) {
    %c0_i32 = arith.constant 0 : i32
    %c0_i32_0 = arith.constant 0 : i32
    %c0_i32_1 = arith.constant 0 : i32
    %c0_i32_2 = arith.constant 0 : i32
    return %c0_i32, %c0_i32_0, %c0_i32_1 : i32, i32, i32
  }
  func.func @transform_3(%arg0: i32) -> (i32, i32, i32) {
    %c0_i32 = arith.constant 0 : i32
    %c0_i32_0 = arith.constant 0 : i32
    %c0_i32_1 = arith.constant 0 : i32
    %c0_i32_2 = arith.constant 0 : i32
    return %c0_i32, %c0_i32_0, %c0_i32_1 : i32, i32, i32
  }
  func.func @transform_4(%arg0: i32) -> (i32, i32) {
    %c0_i32 = arith.constant 0 : i32
    %c0_i32_0 = arith.constant 0 : i32
    %c0_i32_1 = arith.constant 0 : i32
    return %c0_i32, %c0_i32_0 : i32, i32
  }
  func.func @transform_5(%arg0: i32) -> (i32, i32) {
    %c0_i32 = arith.constant 0 : i32
    %c0_i32_0 = arith.constant 0 : i32
    %c0_i32_1 = arith.constant 0 : i32
    return %c0_i32, %c0_i32_0 : i32, i32
  }
  func.func @transform_6(%arg0: i32) -> (i32, i32) {
    %c0_i32 = arith.constant 0 : i32
    %c0_i32_0 = arith.constant 0 : i32
    %c0_i32_1 = arith.constant 0 : i32
    return %c0_i32, %c0_i32_0 : i32, i32
  }
  func.func @transform_7(%arg0: i32) -> (i32, i32) {
    %c0_i32 = arith.constant 0 : i32
    %c0_i32_0 = arith.constant 0 : i32
    %c0_i32_1 = arith.constant 0 : i32
    return %c0_i32, %c0_i32_0 : i32, i32
  }
  func.func @transform_8(%arg0: i32) -> (i32, i32, i32) {
    %c0_i32 = arith.constant 0 : i32
    %c0_i32_0 = arith.constant 0 : i32
    %c0_i32_1 = arith.constant 0 : i32
    return %arg0, %c0_i32, %c0_i32_0 : i32, i32, i32
  }
}

</mosaic_0001>

<llo_original>
// kernel: tpu_custom_call.1
$region0: #{tpu_custom_call.1}
  #allocation0 [shape = 'u32[]', space=smem, size = 0x4, offset = 0x4, fixed_abs, tag = 'smem constant byte address 0x4 - core index']
  #allocation1 [shape = 'u32[144,128]{1,0:T(1,128)}', space=vmem, size = 0x12000, scoped, tag = 'internal scratch']
  %s0 = inlined_call_operand.hbm [shape: f32[2,8,128], index: 0, kind: input, shape index: {}]
  %s1 = inlined_call_operand.hbm [shape: bf16[2,8,8], index: 1, kind: input, shape index: {}]
  %s2 = inlined_call_operand.hbm [shape: f32[2,128,128], index: 2, kind: input, shape index: {}]
  %s3 = inlined_call_operand.vmem [shape: f32[2,1,128], index: 3, kind: input, shape index: {}]
  %s4 = inlined_call_operand.hbm [shape: f32[128,384], index: 4, kind: input, shape index: {}]
  %s5 = inlined_call_operand.vmem [shape: f32[1,384], index: 5, kind: input, shape index: {}]
  %s6 = inlined_call_operand.hbm [shape: f32[128,384], index: 6, kind: input, shape index: {}]
  %s7 = inlined_call_operand.vmem [shape: f32[1,384], index: 7, kind: input, shape index: {}]
  %s8 = inlined_call_operand.hbm [shape: f32[2,8,128], index: 8, kind: output, shape index: {}]
  %s9 = sld [smem:[#allocation0]]
  $region85: #{tpu_custom_call.1} parent=0
    _
  %s11 = ssub.s32 1, %s9
  %s12 = scalar_select 0, %s11, %s9
  $region1: #{tpu_custom_call.1} parent=0
    #allocation2 [shape = 'u8[8192]{0}', space=vmem, size = 0x2000, scoped, tag = 'input window, operand 0']
    #allocation3 [shape = 's32[2]{0}', space=sflag, size = 0x8, scoped, tag = 'scoped memory for tpu_custom_call.1']
    #allocation4 [shape = 's32[2]{0}', space=sflag, size = 0x8, scoped, tag = 'scoped memory for tpu_custom_call.1']
    #allocation5 [shape = 'u8[4096]{0}', space=vmem, size = 0x1000, scoped, tag = 'input window, operand 1']
    #allocation6 [shape = 's32[2]{0}', space=sflag, size = 0x8, scoped, tag = 'scoped memory for tpu_custom_call.1']
    #allocation7 [shape = 'u8[131072]{0}', space=vmem, size = 0x20000, scoped, tag = 'input window, operand 2, single buffered']
    #allocation8 [shape = 'u8[196608]{0}', space=vmem, size = 0x30000, scoped, tag = 'input window, operand 4, single buffered']
    #allocation9 [shape = 's32[1]{0}', space=sflag, size = 0x4, scoped, tag = 'scoped memory for tpu_custom_call.1']
    #allocation10 [shape = 'u8[196608]{0}', space=vmem, size = 0x30000, scoped, tag = 'input window, operand 6, single buffered']
    #allocation11 [shape = 'u8[8192]{0}', space=vmem, size = 0x2000, scoped, tag = 'output window, operand 0']
    %13 = vsyncpa [#allocation3], 0
    %s14 = scalar_lea.sflag [#allocation3], 1
    %15 = vsyncpa %s14, 0
    %16 = vsyncpa [#allocation6], 0
    %s17 = scalar_lea.sflag [#allocation6], 1
    %18 = vsyncpa %s17, 0
    %19 = vsyncpa [#allocation9], 0
    %20 = vsyncpa [#allocation4], 0
    %s21 = scalar_lea.sflag [#allocation4], 1
    %22 = vsyncpa %s21, 0
    loop: start=0, step=1, limit=4
    $region2: #{tpu_custom_call.1} parent=1 // loop_pre_header
      _
    $region3: #{tpu_custom_call.1} parent=1 // loop_header
      %s24 = sphi 0, %s28
      %p25 = scmp.ge.s32.totalorder %s24, 4
      %s34 = sphi 0, %s36
      %s37 = sphi 0, %s34
      %s38 = sphi 0, %s37
      %s54 = sphi 0, %s38
      %s60 = sphi 0, %s62
      %s63 = sphi 0, %s60
      %s64 = sphi 0, %s63
      %s80 = sphi 0, %s64
      %s84 = sphi 0, %s84
      %s86 = sphi 0, %s84
      %s87 = sphi 0, %s86
      %s101 = sphi 0, %s87
      %s105 = sphi 0, %s105
      %s107 = sphi 0, %s105
      %s108 = sphi 0, %s107
      %s122 = sphi 0, %s108
      %s126 = sphi 0, %s126
      %s128 = sphi 0, %s126
      %s129 = sphi 0, %s128
      %s143 = sphi 0, %s129
      %s147 = sphi 0, %s147
      %s149 = sphi 0, %s147
      %s150 = sphi 0, %s149
      %s164 = sphi 0, %s150
      %s168 = sphi 0, %s168
      %s170 = sphi 0, %s168
      %s171 = sphi 0, %s170
      %s185 = sphi 0, %s171
      %s189 = sphi 0, %s189
      %s191 = sphi 0, %s189
      %s192 = sphi 0, %s191
      %s206 = sphi 0, %s192
      %s212 = sphi 0, %s214
      %s215 = sphi 0, %s212
      %s216 = sphi 0, %s215
      %s232 = sphi 0, %s216
    $region4: #{tpu_custom_call.1} parent=1 // loop_header_branch
      %27 = sbr.rel (%p25) target = $region8
    $region5: #{tpu_custom_call.1} parent=1 // loop_body
      %s29 = ssub.s32 %s24, 1
      %s30 = ssub.s32 %s24, 2
      %s31 = sadd.s32 %s24, 1
      %s32 = ssub.s32 %s24, %s31
      %p33 = scmp.eq.s32.totalorder %s32, 0
      %s35 = sadd.s32 %s34, 1
      %s36 = scalar_select %p33, %s34, %s35
      %p39 = pneg %p33
      %p40 = scmp.eq.s32.totalorder %s24, 1
      %p41 = por %p39, %p40
      %p42 = scmp.ne.s32.totalorder %s34, %s37
      %p43 = scmp.eq.s32.totalorder %s24, 0
      %p44 = por %p42, %p43
      %p45 = scmp.ne.s32.totalorder %s34, %s37
      %p46 = scmp.eq.s32.totalorder %s29, 1
      %p47 = por %p45, %p46
      %p48 = scmp.ne.s32.totalorder %s37, %s38
      %p49 = scmp.eq.s32.totalorder %s29, 0
      %p50 = por %p48, %p49
      %p51 = scmp.ne.s32.totalorder %s37, %s38
      %p52 = scmp.eq.s32.totalorder %s30, 1
      %p53 = por %p51, %p52
      %p55 = scmp.ne.s32.totalorder %s38, %s54
      %p56 = scmp.eq.s32.totalorder %s30, 0
      %p57 = por %p55, %p56
      %s58 = ssub.s32 %s24, %s31
      %p59 = scmp.eq.s32.totalorder %s58, 0
      %s61 = sadd.s32 %s60, 1
      %s62 = scalar_select %p59, %s60, %s61
      %p65 = pneg %p59
      %p66 = scmp.eq.s32.totalorder %s24, 1
      %p67 = por %p65, %p66
      %p68 = scmp.ne.s32.totalorder %s60, %s63
      %p69 = scmp.eq.s32.totalorder %s24, 0
      %p70 = por %p68, %p69
      %p71 = scmp.ne.s32.totalorder %s60, %s63
      %p72 = scmp.eq.s32.totalorder %s29, 1
      %p73 = por %p71, %p72
      %p74 = scmp.ne.s32.totalorder %s63, %s64
      %p75 = scmp.eq.s32.totalorder %s29, 0
      %p76 = por %p74, %p75
      %p77 = scmp.ne.s32.totalorder %s63, %s64
      %p78 = scmp.eq.s32.totalorder %s30, 1
      %p79 = por %p77, %p78
      %p81 = scmp.ne.s32.totalorder %s64, %s80
      %p82 = scmp.eq.s32.totalorder %s30, 0
      %p83 = por %p81, %p82
      %s85 = sadd.s32 %s84, 1
      %p88 = scmp.eq.s32.totalorder %s24, 1
      %p89 = scmp.ne.s32.totalorder %s84, %s86
      %p90 = scmp.eq.s32.totalorder %s24, 0
      %p91 = por %p89, %p90
      %p92 = scmp.ne.s32.totalorder %s84, %s86
      %p93 = scmp.eq.s32.totalorder %s29, 1
      %p94 = por %p92, %p93
      %p95 = scmp.ne.s32.totalorder %s86, %s87
      %p96 = scmp.eq.s32.totalorder %s29, 0
      %p97 = por %p95, %p96
      %p98 = scmp.ne.s32.totalorder %s86, %s87
      %p99 = scmp.eq.s32.totalorder %s30, 1
      %p100 = por %p98, %p99
      %p102 = scmp.ne.s32.totalorder %s87, %s101
      %p103 = scmp.eq.s32.totalorder %s30, 0
      %p104 = por %p102, %p103
      %s106 = sadd.s32 %s105, 1
      %p109 = scmp.eq.s32.totalorder %s24, 1
      %p110 = scmp.ne.s32.totalorder %s105, %s107
      %p111 = scmp.eq.s32.totalorder %s24, 0
      %p112 = por %p110, %p111
      %p113 = scmp.ne.s32.totalorder %s105, %s107
      %p114 = scmp.eq.s32.totalorder %s29, 1
      %p115 = por %p113, %p114
      %p116 = scmp.ne.s32.totalorder %s107, %s108
      %p117 = scmp.eq.s32.totalorder %s29, 0
      %p118 = por %p116, %p117
      %p119 = scmp.ne.s32.totalorder %s107, %s108
      %p120 = scmp.eq.s32.totalorder %s30, 1
      %p121 = por %p119, %p120
      %p123 = scmp.ne.s32.totalorder %s108, %s122
      %p124 = scmp.eq.s32.totalorder %s30, 0
      %p125 = por %p123, %p124
      %s127 = sadd.s32 %s126, 1
      %p130 = scmp.eq.s32.totalorder %s24, 1
      %p131 = scmp.ne.s32.totalorder %s126, %s128
      %p132 = scmp.eq.s32.totalorder %s24, 0
      %p133 = por %p131, %p132
      %p134 = scmp.ne.s32.totalorder %s126, %s128
      %p135 = scmp.eq.s32.totalorder %s29, 1
      %p136 = por %p134, %p135
      %p137 = scmp.ne.s32.totalorder %s128, %s129
      %p138 = scmp.eq.s32.totalorder %s29, 0
      %p139 = por %p137, %p138
      %p140 = scmp.ne.s32.totalorder %s128, %s129
      %p141 = scmp.eq.s32.totalorder %s30, 1
      %p142 = por %p140, %p141
      %p144 = scmp.ne.s32.totalorder %s129, %s143
      %p145 = scmp.eq.s32.totalorder %s30, 0
      %p146 = por %p144, %p145
      %s148 = sadd.s32 %s147, 1
      %p151 = scmp.eq.s32.totalorder %s24, 1
      %p152 = scmp.ne.s32.totalorder %s147, %s149
      %p153 = scmp.eq.s32.totalorder %s24, 0
      %p154 = por %p152, %p153
      %p155 = scmp.ne.s32.totalorder %s147, %s149
      %p156 = scmp.eq.s32.totalorder %s29, 1
      %p157 = por %p155, %p156
      %p158 = scmp.ne.s32.totalorder %s149, %s150
      %p159 = scmp.eq.s32.totalorder %s29, 0
      %p160 = por %p158, %p159
      %p161 = scmp.ne.s32.totalorder %s149, %s150
      %p162 = scmp.eq.s32.totalorder %s30, 1
      %p163 = por %p161, %p162
      %p165 = scmp.ne.s32.totalorder %s150, %s164
      %p166 = scmp.eq.s32.totalorder %s30, 0
      %p167 = por %p165, %p166
      %s169 = sadd.s32 %s168, 1
      %p172 = scmp.eq.s32.totalorder %s24, 1
      %p173 = scmp.ne.s32.totalorder %s168, %s170
      %p174 = scmp.eq.s32.totalorder %s24, 0
      %p175 = por %p173, %p174
      %p176 = scmp.ne.s32.totalorder %s168, %s170
      %p177 = scmp.eq.s32.totalorder %s29, 1
      %p178 = por %p176, %p177
      %p179 = scmp.ne.s32.totalorder %s170, %s171
      %p180 = scmp.eq.s32.totalorder %s29, 0
      %p181 = por %p179, %p180
      %p182 = scmp.ne.s32.totalorder %s170, %s171
      %p183 = scmp.eq.s32.totalorder %s30, 1
      %p184 = por %p182, %p183
      %p186 = scmp.ne.s32.totalorder %s171, %s185
      %p187 = scmp.eq.s32.totalorder %s30, 0
      %p188 = por %p186, %p187
      %s190 = sadd.s32 %s189, 1
      %p193 = scmp.eq.s32.totalorder %s24, 1
      %p194 = scmp.ne.s32.totalorder %s189, %s191
      %p195 = scmp.eq.s32.totalorder %s24, 0
      %p196 = por %p194, %p195
      %p197 = scmp.ne.s32.totalorder %s189, %s191
      %p198 = scmp.eq.s32.totalorder %s29, 1
      %p199 = por %p197, %p198
      %p200 = scmp.ne.s32.totalorder %s191, %s192
      %p201 = scmp.eq.s32.totalorder %s29, 0
      %p202 = por %p200, %p201
      %p203 = scmp.ne.s32.totalorder %s191, %s192
      %p204 = scmp.eq.s32.totalorder %s30, 1
      %p205 = por %p203, %p204
      %p207 = scmp.ne.s32.totalorder %s192, %s206
      %p208 = scmp.eq.s32.totalorder %s30, 0
      %p209 = por %p207, %p208
      %s210 = ssub.s32 %s24, %s31
      %p211 = scmp.eq.s32.totalorder %s210, 0
      %s213 = sadd.s32 %s212, 1
      %s214 = scalar_select %p211, %s212, %s213
      %p217 = pneg %p211
      %p218 = scmp.eq.s32.totalorder %s24, 1
      %p219 = por %p217, %p218
      %p220 = scmp.ne.s32.totalorder %s212, %s215
      %p221 = scmp.eq.s32.totalorder %s24, 0
      %p222 = por %p220, %p221
      %p223 = scmp.ne.s32.totalorder %s212, %s215
      %p224 = scmp.eq.s32.totalorder %s29, 1
      %p225 = por %p223, %p224
      %p226 = scmp.ne.s32.totalorder %s215, %s216
      %p227 = scmp.eq.s32.totalorder %s29, 0
      %p228 = por %p226, %p227
      %p229 = scmp.ne.s32.totalorder %s215, %s216
      %p230 = scmp.eq.s32.totalorder %s30, 1
      %p231 = por %p229, %p230
      %p233 = scmp.ne.s32.totalorder %s216, %s232
      %p234 = scmp.eq.s32.totalorder %s30, 0
      %p235 = por %p233, %p234
      %p236 = scmp.le.s32.totalorder 1, %s24
      %p237 = scmp.lt.s32.totalorder %s24, 3
      %p238 = pnand %p236, %p237
      %p239 = pneg %p238
      // Predicated region
      $region9: #{tpu_custom_call.1} parent=5 // pred_check
        _
      $region10: #{tpu_custom_call.1} parent=5 // pred_check_branch
        %241 = sbr.rel (%p238) target = $region12
      $region11: #{tpu_custom_call.1} parent=5 // pred_region
        %s242 = ssub.s32 %s24, 1
        // Predicated region
        $region13: #{tpu_custom_call.1} parent=11 // pred_check
          %p243 = pneg %p97
        $region14: #{tpu_custom_call.1} parent=11 // pred_check_branch
          %245 = sbr.rel (%p243) target = $region16
        $region15: #{tpu_custom_call.1} parent=11 // pred_region
          %s247 = ssub.s32 4096, 4096
          %248 = vsyncadd [#allocation6], %s247
          %s249 = sshll.u32 [#allocation7], 4
          %s250 = int_to_ptr.vmem [resolvable:$true] %s249
          %255 = dma.hbm_to_vmem [thread:$0]  %s2, 4096, %s250, [#allocation6], 128, 128, 8
        $region16: #{tpu_custom_call.1} parent=11 // pred_fallthru
          _
        // Predicated region
        $region17: #{tpu_custom_call.1} parent=11 // pred_check
          %p256 = pneg %p118
        $region18: #{tpu_custom_call.1} parent=11 // pred_check_branch
          %258 = sbr.rel (%p256) target = $region20
        $region19: #{tpu_custom_call.1} parent=11 // pred_region
          _
        $region20: #{tpu_custom_call.1} parent=11 // pred_fallthru
          _
        // Predicated region
        $region21: #{tpu_custom_call.1} parent=11 // pred_check
          %p259 = pneg %p139
        $region22: #{tpu_custom_call.1} parent=11 // pred_check_branch
          %261 = sbr.rel (%p259) target = $region24
        $region23: #{tpu_custom_call.1} parent=11 // pred_region
          %s263 = ssub.s32 6144, 6144
          %264 = vsyncadd [#allocation9], %s263
          %s265 = sshll.u32 [#allocation8], 4
          %s266 = int_to_ptr.vmem [resolvable:$true] %s265
          %271 = dma.hbm_to_vmem [thread:$0]  %s4, 6144, %s266, [#allocation9], 384, 384, 24
        $region24: #{tpu_custom_call.1} parent=11 // pred_fallthru
          _
        // Predicated region
        $region25: #{tpu_custom_call.1} parent=11 // pred_check
          %p272 = pneg %p160
        $region26: #{tpu_custom_call.1} parent=11 // pred_check_branch
          %274 = sbr.rel (%p272) target = $region28
        $region27: #{tpu_custom_call.1} parent=11 // pred_region
          _
        $region28: #{tpu_custom_call.1} parent=11 // pred_fallthru
          _
        // Predicated region
        $region29: #{tpu_custom_call.1} parent=11 // pred_check
          %p275 = pneg %p181
        $region30: #{tpu_custom_call.1} parent=11 // pred_check_branch
          %277 = sbr.rel (%p275) target = $region32
        $region31: #{tpu_custom_call.1} parent=11 // pred_region
          %s279 = ssub.s32 6144, 6144
          %280 = vsyncadd [#allocation9], %s279
          %s281 = sshll.u32 [#allocation10], 4
          %s282 = int_to_ptr.vmem [resolvable:$true] %s281
          %287 = dma.hbm_to_vmem [thread:$0]  %s6, 6144, %s282, [#allocation9], 384, 384, 24
        $region32: #{tpu_custom_call.1} parent=11 // pred_fallthru
          _
        // Predicated region
        $region33: #{tpu_custom_call.1} parent=11 // pred_check
          %p288 = pneg %p202
        $region34: #{tpu_custom_call.1} parent=11 // pred_check_branch
          %290 = sbr.rel (%p288) target = $region36
        $region35: #{tpu_custom_call.1} parent=11 // pred_region
          _
        $region36: #{tpu_custom_call.1} parent=11 // pred_fallthru
          _
      $region12: #{tpu_custom_call.1} parent=5 // pred_fallthru
        _
      %p291 = scmp.lt.s32.totalorder %s24, 2
      // Predicated region
      $region37: #{tpu_custom_call.1} parent=5 // pred_check
        %p292 = pneg %p291
      $region38: #{tpu_custom_call.1} parent=5 // pred_check_branch
        %294 = sbr.rel (%p292) target = $region40
      $region39: #{tpu_custom_call.1} parent=5 // pred_region
        // Predicated region
        $region41: #{tpu_custom_call.1} parent=39 // pred_check
          %p295 = pneg %p44
        $region42: #{tpu_custom_call.1} parent=39 // pred_check_branch
          %297 = sbr.rel (%p295) target = $region44
        $region43: #{tpu_custom_call.1} parent=39 // pred_region
          %s298 = sand.u32 %s34, 1
          %s299 = scalar_lea.sflag [#allocation3], %s298
          %s300 = sand.u32 %s34, 1
          %s301 = smul.addr %s300, 8
          %s302 = scalar_lea.vmem [#allocation2], %s301
          %s304 = ssub.s32 128, 128
          %305 = vsyncadd %s299, %s304
          %s306 = smul.addr %s24, 128
          %s307 = scalar_lea.hbm %s0, %s306
          %s309 = sshll.u32 %s302, 4
          %s310 = int_to_ptr.vmem [resolvable:$true] %s309
          %312 = dma.hbm_to_vmem [thread:$0]  %s307, 128, %s310, %s299
        $region44: #{tpu_custom_call.1} parent=39 // pred_fallthru
          _
        // Predicated region
        $region45: #{tpu_custom_call.1} parent=39 // pred_check
          %p313 = pneg %p70
        $region46: #{tpu_custom_call.1} parent=39 // pred_check_branch
          %315 = sbr.rel (%p313) target = $region48
        $region47: #{tpu_custom_call.1} parent=39 // pred_region
          %s316 = sand.u32 %s24, 1
          %s317 = scalar_lea.sflag [#allocation6], %s316
          %s318 = sand.u32 %s60, 1
          %s319 = smul.addr %s318, 4
          %s320 = scalar_lea.vmem [#allocation5], %s319
          %s322 = ssub.s32 64, 64
          %323 = vsyncadd %s317, %s322
          %s324 = smul.addr %s24, 64
          %s325 = scalar_lea.hbm %s1, %s324
          %s327 = sshll.u32 %s320, 4
          %s328 = int_to_ptr.vmem [resolvable:$true] %s327
          %330 = dma.hbm_to_vmem [thread:$0]  %s325, 64, %s328, %s317
        $region48: #{tpu_custom_call.1} parent=39 // pred_fallthru
          _
      $region40: #{tpu_custom_call.1} parent=5 // pred_fallthru
        _
      %p331 = scmp.le.s32.totalorder 1, %s24
      %p332 = scmp.lt.s32.totalorder %s24, 3
      %p333 = pnand %p331, %p332
      %p334 = pneg %p333
      // Predicated region
      $region49: #{tpu_custom_call.1} parent=5 // pred_check
        _
      $region50: #{tpu_custom_call.1} parent=5 // pred_check_branch
        %336 = sbr.rel (%p333) target = $region52
      $region51: #{tpu_custom_call.1} parent=5 // pred_region
        %s337 = ssub.s32 %s24, 1
        %s338 = sand.u32 %s37, 1
        %s339 = scalar_lea.sflag [#allocation3], %s338
        %s340 = sand.u32 %s37, 1
        %s341 = smul.addr %s340, 8
        %s342 = scalar_lea.vmem [#allocation2], %s341
        // Predicated region
        $region53: #{tpu_custom_call.1} parent=51 // pred_check
          %p343 = pneg %p50
        $region54: #{tpu_custom_call.1} parent=51 // pred_check_branch
          %345 = sbr.rel (%p343) target = $region56
        $region55: #{tpu_custom_call.1} parent=51 // pred_region
          %346 = dma.done %s339, 128
        $region56: #{tpu_custom_call.1} parent=51 // pred_fallthru
          _
        %s347 = sand.u32 %s29, 1
        %s348 = scalar_lea.sflag [#allocation6], %s347
        %s349 = sand.u32 %s63, 1
        %s350 = smul.addr %s349, 4
        %s351 = scalar_lea.vmem [#allocation5], %s350
        // Predicated region
        $region57: #{tpu_custom_call.1} parent=51 // pred_check
          %p352 = pneg %p76
        $region58: #{tpu_custom_call.1} parent=51 // pred_check_branch
          %354 = sbr.rel (%p352) target = $region60
        $region59: #{tpu_custom_call.1} parent=51 // pred_region
          %355 = dma.done %s348, 64
        $region60: #{tpu_custom_call.1} parent=51 // pred_fallthru
          _
        // Predicated region
        $region61: #{tpu_custom_call.1} parent=51 // pred_check
          %p356 = pneg %p97
        $region62: #{tpu_custom_call.1} parent=51 // pred_check_branch
          %358 = sbr.rel (%p356) target = $region64
        $region63: #{tpu_custom_call.1} parent=51 // pred_region
          %359 = dma.done [#allocation6], 4096
        $region64: #{tpu_custom_call.1} parent=51 // pred_fallthru
          _
        // Predicated region
        $region65: #{tpu_custom_call.1} parent=51 // pred_check
          %p360 = pneg %p139
        $region66: #{tpu_custom_call.1} parent=51 // pred_check_branch
          %362 = sbr.rel (%p360) target = $region68
        $region67: #{tpu_custom_call.1} parent=51 // pred_region
          %363 = dma.done [#allocation9], 6144
        $region68: #{tpu_custom_call.1} parent=51 // pred_fallthru
          _
        // Predicated region
        $region69: #{tpu_custom_call.1} parent=51 // pred_check
          %p364 = pneg %p181
        $region70: #{tpu_custom_call.1} parent=51 // pred_check_branch
          %366 = sbr.rel (%p364) target = $region72
        $region71: #{tpu_custom_call.1} parent=51 // pred_region
          %367 = dma.done [#allocation9], 6144
        $region72: #{tpu_custom_call.1} parent=51 // pred_fallthru
          _
        %s368 = sand.u32 %s37, 1
        %s369 = scalar_lea.sflag [#allocation3], %s368
        %s370 = sand.u32 %s37, 1
        %s371 = smul.addr %s370, 8
        %s372 = scalar_lea.vmem [#allocation2], %s371
        %p373 = pneg %p50
        %p374 = pneg %p47
        %s375 = sand.u32 %s29, 1
        %s376 = scalar_lea.sflag [#allocation6], %s375
        %s377 = sand.u32 %s63, 1
        %s378 = smul.addr %s377, 4
        %s379 = scalar_lea.vmem [#allocation5], %s378
        %p380 = pneg %p76
        %p381 = pneg %p73
        %p382 = pneg %p97
        %p383 = pneg %p94
        %p384 = pneg %p118
        %p385 = pneg %p115
        %p386 = pneg %p139
        %p387 = pneg %p136
        %p388 = pneg %p160
        %p389 = pneg %p157
        %p390 = pneg %p181
        %p391 = pneg %p178
        %p392 = pneg %p202
        %p393 = pneg %p199
        %p394 = pneg %p228
        %p395 = pneg %p225
        %s396 = sand.u32 %s215, 1
        %s397 = scalar_lea.sflag [#allocation4], %s396
        %s398 = sand.u32 %s215, 1
        %s399 = smul.addr %s398, 8
        %s400 = scalar_lea.vmem [#allocation11], %s399
        %v402 = vld [vmem:[%s342] sm:$0xff]
        %v403 = vld [vmem:[#allocation7] sm:$0xff]
        %v404 = vld [vmem:[#allocation7 + $0x8] sm:$0xff]
        %v405 = vld [vmem:[#allocation7 + $0x10] sm:$0xff]
        %v406 = vld [vmem:[#allocation7 + $0x18] sm:$0xff]
        %v407 = vld [vmem:[#allocation7 + $0x20] sm:$0xff]
        %v408 = vld [vmem:[#allocation7 + $0x28] sm:$0xff]
        %v409 = vld [vmem:[#allocation7 + $0x30] sm:$0xff]
        %v410 = vld [vmem:[#allocation7 + $0x38] sm:$0xff]
        %v411 = vld [vmem:[#allocation7 + $0x40] sm:$0xff]
        %v412 = vld [vmem:[#allocation7 + $0x48] sm:$0xff]
        %v413 = vld [vmem:[#allocation7 + $0x50] sm:$0xff]
        %v414 = vld [vmem:[#allocation7 + $0x58] sm:$0xff]
        %v415 = vld [vmem:[#allocation7 + $0x60] sm:$0xff]
        %v416 = vld [vmem:[#allocation7 + $0x68] sm:$0xff]
        %v417 = vld [vmem:[#allocation7 + $0x70] sm:$0xff]
        %v418 = vld [vmem:[#allocation7 + $0x78] sm:$0xff]
        %v419 = vld [vmem:[%s3] sm:$0x1]
        %v421 = vlaneseq
        %v422 = vshrl.u32 %v421, 7
        %v423 = vsub.s32 0, %v422
        %v424 = vrot.slane %v419, %v423
        %426 = vmatprep.subr.mxu0 0.0
        %427 = vmatpush1.msra.mxu0 %v403
        %428 = vmatprep.subr.mxu0 0.0
        %429 = vmatpush1.msra.mxu0 %v404
        %430 = vmatprep.subr.mxu0 0.0
        %431 = vmatpush1.msra.mxu0 %v405
        %432 = vmatprep.subr.mxu0 0.0
        %433 = vmatpush1.msra.mxu0 %v406
        %434 = vmatprep.subr.mxu0 0.0
        %435 = vmatpush1.msra.mxu0 %v407
        %436 = vmatprep.subr.mxu0 0.0
        %437 = vmatpush1.msra.mxu0 %v408
        %438 = vmatprep.subr.mxu0 0.0
        %439 = vmatpush1.msra.mxu0 %v409
        %440 = vmatprep.subr.mxu0 0.0
        %441 = vmatpush1.msra.mxu0 %v410
        %442 = vmatprep.subr.mxu0 0.0
        %443 = vmatpush1.msra.mxu0 %v411
        %444 = vmatprep.subr.mxu0 0.0
        %445 = vmatpush1.msra.mxu0 %v412
        %446 = vmatprep.subr.mxu0 0.0
        %447 = vmatpush1.msra.mxu0 %v413
        %448 = vmatprep.subr.mxu0 0.0
        %449 = vmatpush1.msra.mxu0 %v414
        %450 = vmatprep.subr.mxu0 0.0
        %451 = vmatpush1.msra.mxu0 %v415
        %452 = vmatprep.subr.mxu0 0.0
        %453 = vmatpush1.msra.mxu0 %v416
        %454 = vmatprep.subr.mxu0 0.0
        %455 = vmatpush1.msra.mxu0 %v417
        %456 = vmatprep.subr.mxu0 0.0
        %457 = vmatpush1.msra.mxu0 %v418
        %458 = vmatprep.subr.mxu0 0.0
        %459 = vmatpush1.msra.mxu0 0.0
        %460 = vmatprep.subr.mxu0 0.0
        %461 = vmatpush1.msra.mxu0 0.0
        %462 = vmatprep.subr.mxu0 0.0
        %463 = vmatpush1.msra.mxu0 0.0
        %464 = vmatprep.subr.mxu0 0.0
        %465 = vmatpush1.msra.mxu0 0.0
        %466 = vmatprep.subr.mxu0 0.0
        %467 = vmatpush1.msra.mxu0 0.0
        %468 = vmatprep.subr.mxu0 0.0
        %469 = vmatpush1.msra.mxu0 0.0
        %470 = vmatprep.subr.mxu0 0.0
        %471 = vmatpush1.msra.mxu0 0.0
        %472 = vmatprep.subr.mxu0 0.0
        %473 = vmatpush1.msra.mxu0 0.0
        %474 = vmatprep.subr.mxu0 0.0
        %475 = vmatpush1.msra.mxu0 0.0
        %476 = vmatprep.subr.mxu0 0.0
        %477 = vmatpush1.msra.mxu0 0.0
        %478 = vmatprep.subr.mxu0 0.0
        %479 = vmatpush1.msra.mxu0 0.0
        %480 = vmatprep.subr.mxu0 0.0
        %481 = vmatpush1.msra.mxu0 0.0
        %482 = vmatprep.subr.mxu0 0.0
        %483 = vmatpush1.msra.mxu0 0.0
        %484 = vmatprep.subr.mxu0 0.0
        %485 = vmatpush1.msra.mxu0 0.0
        %486 = vmatprep.subr.mxu0 0.0
        %487 = vmatpush1.msra.mxu0 0.0
        %488 = vmatprep.subr.mxu0 0.0
        %489 = vmatpush1.msra.mxu0 0.0
        %490 = vmatprep.mubr.f32.mxu0 0.0
        %491 = vmatmul.mubr.f32.gmra.mrb[0].mxu0 %v402
        %v492 = vpop.f32.mrb[0].mxu0
        %v493 = vadd.f32 %v424, %v492
        %v494 = vpop.f32.mrb[0].mxu0
        %495 = vdwg.mxu0
        %v496 = vmax.f32 %v493, 0.0
        %s497 = scalar_lea.vmem [#allocation7], 128
        %v498 = vld [vmem:[%s497] sm:$0xff]
        %v499 = vld [vmem:[%s497 + $0x8] sm:$0xff]
        %v500 = vld [vmem:[%s497 + $0x10] sm:$0xff]
        %v501 = vld [vmem:[%s497 + $0x18] sm:$0xff]
        %v502 = vld [vmem:[%s497 + $0x20] sm:$0xff]
        %v503 = vld [vmem:[%s497 + $0x28] sm:$0xff]
        %v504 = vld [vmem:[%s497 + $0x30] sm:$0xff]
        %v505 = vld [vmem:[%s497 + $0x38] sm:$0xff]
        %v506 = vld [vmem:[%s497 + $0x40] sm:$0xff]
        %v507 = vld [vmem:[%s497 + $0x48] sm:$0xff]
        %v508 = vld [vmem:[%s497 + $0x50] sm:$0xff]
        %v509 = vld [vmem:[%s497 + $0x58] sm:$0xff]
        %v510 = vld [vmem:[%s497 + $0x60] sm:$0xff]
        %v511 = vld [vmem:[%s497 + $0x68] sm:$0xff]
        %v512 = vld [vmem:[%s497 + $0x70] sm:$0xff]
        %v513 = vld [vmem:[%s497 + $0x78] sm:$0xff]
        %s514 = scalar_lea.vmem %s3, 1
        %v515 = vld [vmem:[%s514] sm:$0x1]
        %v517 = vlaneseq
        %v518 = vshrl.u32 %v517, 7
        %v519 = vsub.s32 0, %v518
        %v520 = vrot.slane %v515, %v519
        %522 = vmatprep.subr.mxu0 0.0
        %523 = vmatpush1.msra.mxu0 %v498
        %524 = vmatprep.subr.mxu0 0.0
        %525 = vmatpush1.msra.mxu0 %v499
        %526 = vmatprep.subr.mxu0 0.0
        %527 = vmatpush1.msra.mxu0 %v500
        %528 = vmatprep.subr.mxu0 0.0
        %529 = vmatpush1.msra.mxu0 %v501
        %530 = vmatprep.subr.mxu0 0.0
        %531 = vmatpush1.msra.mxu0 %v502
        %532 = vmatprep.subr.mxu0 0.0
        %533 = vmatpush1.msra.mxu0 %v503
        %534 = vmatprep.subr.mxu0 0.0
        %535 = vmatpush1.msra.mxu0 %v504
        %536 = vmatprep.subr.mxu0 0.0
        %537 = vmatpush1.msra.mxu0 %v505
        %538 = vmatprep.subr.mxu0 0.0
        %539 = vmatpush1.msra.mxu0 %v506
        %540 = vmatprep.subr.mxu0 0.0
        %541 = vmatpush1.msra.mxu0 %v507
        %542 = vmatprep.subr.mxu0 0.0
        %543 = vmatpush1.msra.mxu0 %v508
        %544 = vmatprep.subr.mxu0 0.0
        %545 = vmatpush1.msra.mxu0 %v509
        %546 = vmatprep.subr.mxu0 0.0
        %547 = vmatpush1.msra.mxu0 %v510
        %548 = vmatprep.subr.mxu0 0.0
        %549 = vmatpush1.msra.mxu0 %v511
        %550 = vmatprep.subr.mxu0 0.0
        %551 = vmatpush1.msra.mxu0 %v512
        %552 = vmatprep.subr.mxu0 0.0
        %553 = vmatpush1.msra.mxu0 %v513
        %554 = vmatprep.subr.mxu0 0.0
        %555 = vmatpush1.msra.mxu0 0.0
        %556 = vmatprep.subr.mxu0 0.0
        %557 = vmatpush1.msra.mxu0 0.0
        %558 = vmatprep.subr.mxu0 0.0
        %559 = vmatpush1.msra.mxu0 0.0
        %560 = vmatprep.subr.mxu0 0.0
        %561 = vmatpush1.msra.mxu0 0.0
        %562 = vmatprep.subr.mxu0 0.0
        %563 = vmatpush1.msra.mxu0 0.0
        %564 = vmatprep.subr.mxu0 0.0
        %565 = vmatpush1.msra.mxu0 0.0
        %566 = vmatprep.subr.mxu0 0.0
        %567 = vmatpush1.msra.mxu0 0.0
        %568 = vmatprep.subr.mxu0 0.0
        %569 = vmatpush1.msra.mxu0 0.0
        %570 = vmatprep.subr.mxu0 0.0
        %571 = vmatpush1.msra.mxu0 0.0
        %572 = vmatprep.subr.mxu0 0.0
        %573 = vmatpush1.msra.mxu0 0.0
        %574 = vmatprep.subr.mxu0 0.0
        %575 = vmatpush1.msra.mxu0 0.0
        %576 = vmatprep.subr.mxu0 0.0
        %577 = vmatpush1.msra.mxu0 0.0
        %578 = vmatprep.subr.mxu0 0.0
        %579 = vmatpush1.msra.mxu0 0.0
        %580 = vmatprep.subr.mxu0 0.0
        %581 = vmatpush1.msra.mxu0 0.0
        %582 = vmatprep.subr.mxu0 0.0
        %583 = vmatpush1.msra.mxu0 0.0
        %584 = vmatprep.subr.mxu0 0.0
        %585 = vmatpush1.msra.mxu0 0.0
        %586 = vmatprep.mubr.f32.mxu0 0.0
        %587 = vmatmul.mubr.f32.gmra.mrb[0].mxu0 %v496
        %v588 = vpop.f32.mrb[0].mxu0
        %v589 = vadd.f32 %v520, %v588
        %v590 = vpop.f32.mrb[0].mxu0
        %591 = vdwg.mxu0
        %v592 = vmax.f32 %v589, 0.0
        %v593 = vpack.c.bf16 %v592, %v592
        %v594 = vld [vmem:[%s351] sm:$0xf]
        %vm595 = vcmask 64512
        %v597 = vsel %vm595, %v594, 0
        %vm599 = vcmask 1043456
        %v601 = vsel %vm599, %v593, 0
        %603 = vmatprep.subr.bf16.mxu0 0
        %604 = vmatpush1.bf16.msra.mxu0 %v601
        %605 = vmatprep.subr.bf16.mxu0 0
        %606 = vmatpush1.bf16.msra.mxu0 0
        %607 = vmatprep.subr.bf16.mxu0 0
        %608 = vmatpush1.bf16.msra.mxu0 0
        %609 = vmatprep.subr.bf16.mxu0 0
        %610 = vmatpush1.bf16.msra.mxu0 0
        %611 = vmatprep.subr.bf16.mxu0 0
        %612 = vmatpush1.bf16.msra.mxu0 0
        %613 = vmatprep.subr.bf16.mxu0 0
        %614 = vmatpush1.bf16.msra.mxu0 0
        %615 = vmatprep.subr.bf16.mxu0 0
        %616 = vmatpush1.bf16.msra.mxu0 0
        %617 = vmatprep.subr.bf16.mxu0 0
        %618 = vmatpush1.bf16.msra.mxu0 0
        %619 = vmatprep.subr.bf16.mxu0 0
        %620 = vmatpush1.bf16.msra.mxu0 0
        %621 = vmatprep.subr.bf16.mxu0 0
        %622 = vmatpush1.bf16.msra.mxu0 0
        %623 = vmatprep.subr.bf16.mxu0 0
        %624 = vmatpush1.bf16.msra.mxu0 0
        %625 = vmatprep.subr.bf16.mxu0 0
        %626 = vmatpush1.bf16.msra.mxu0 0
        %627 = vmatprep.subr.bf16.mxu0 0
        %628 = vmatpush1.bf16.msra.mxu0 0
        %629 = vmatprep.subr.bf16.mxu0 0
        %630 = vmatpush1.bf16.msra.mxu0 0
        %631 = vmatprep.subr.bf16.mxu0 0
        %632 = vmatpush1.bf16.msra.mxu0 0
        %633 = vmatprep.subr.bf16.mxu0 0
        %634 = vmatpush1.bf16.msra.mxu0 0
        %635 = vmatprep.mubr.bf16.mxu0 0
        %636 = vmatmul.mubr.bf16.gmra.mrb[0].mxu0 %v597
        %v637 = vpop.f32.mrb[0].mxu0
        %v638 = vadd.f32 0.0, %v637
        %v639 = vpop.f32.mrb[0].mxu0
        %v640 = vpop.f32.mrb[0].mxu0
        %v641 = vpop.f32.mrb[0].mxu0
        %642 = vdwg.mxu0
        %v643 = vmax.f32 %v638, 0.0
        %v644 = vld [vmem:[#allocation8] sm:$0xff]
        %v645 = vld [vmem:[#allocation8 + $0x8] sm:$0xff]
        %v646 = vld [vmem:[#allocation8 + $0x10] sm:$0xff]
        %v647 = vld [vmem:[#allocation8 + $0x18] sm:$0xff]
        %v648 = vld [vmem:[#allocation8 + $0x20] sm:$0xff]
        %v649 = vld [vmem:[#allocation8 + $0x28] sm:$0xff]
        %v650 = vld [vmem:[#allocation8 + $0x30] sm:$0xff]
        %v651 = vld [vmem:[#allocation8 + $0x38] sm:$0xff]
        %v652 = vld [vmem:[#allocation8 + $0x40] sm:$0xff]
        %v653 = vld [vmem:[#allocation8 + $0x48] sm:$0xff]
        %v654 = vld [vmem:[#allocation8 + $0x50] sm:$0xff]
        %v655 = vld [vmem:[#allocation8 + $0x58] sm:$0xff]
        %v656 = vld [vmem:[#allocation8 + $0x60] sm:$0xff]
        %v657 = vld [vmem:[#allocation8 + $0x68] sm:$0xff]
        %v658 = vld [vmem:[#allocation8 + $0x70] sm:$0xff]
        %v659 = vld [vmem:[#allocation8 + $0x78] sm:$0xff]
        %v660 = vld [vmem:[#allocation8 + $0x80] sm:$0xff]
        %v661 = vld [vmem:[#allocation8 + $0x88] sm:$0xff]
        %v662 = vld [vmem:[#allocation8 + $0x90] sm:$0xff]
        %v663 = vld [vmem:[#allocation8 + $0x98] sm:$0xff]
        %v664 = vld [vmem:[#allocation8 + $0xa0] sm:$0xff]
        %v665 = vld [vmem:[#allocation8 + $0xa8] sm:$0xff]
        %v666 = vld [vmem:[#allocation8 + $0xb0] sm:$0xff]
        %v667 = vld [vmem:[#allocation8 + $0xb8] sm:$0xff]
        %v668 = vld [vmem:[#allocation8 + $0xc0] sm:$0xff]
        %v669 = vld [vmem:[#allocation8 + $0xc8] sm:$0xff]
        %v670 = vld [vmem:[#allocation8 + $0xd0] sm:$0xff]
        %v671 = vld [vmem:[#allocation8 + $0xd8] sm:$0xff]
        %v672 = vld [vmem:[#allocation8 + $0xe0] sm:$0xff]
        %v673 = vld [vmem:[#allocation8 + $0xe8] sm:$0xff]
        %v674 = vld [vmem:[#allocation8 + $0xf0] sm:$0xff]
        %v675 = vld [vmem:[#allocation8 + $0xf8] sm:$0xff]
        %v676 = vld [vmem:[#allocation8 + $0x100] sm:$0xff]
        %v677 = vld [vmem:[#allocation8 + $0x108] sm:$0xff]
        %v678 = vld [vmem:[#allocation8 + $0x110] sm:$0xff]
        %v679 = vld [vmem:[#allocation8 + $0x118] sm:$0xff]
        %v680 = vld [vmem:[#allocation8 + $0x120] sm:$0xff]
        %v681 = vld [vmem:[#allocation8 + $0x128] sm:$0xff]
        %v682 = vld [vmem:[#allocation8 + $0x130] sm:$0xff]
        %v683 = vld [vmem:[#allocation8 + $0x138] sm:$0xff]
        %v684 = vld [vmem:[#allocation8 + $0x140] sm:$0xff]
        %v685 = vld [vmem:[#allocation8 + $0x148] sm:$0xff]
        %v686 = vld [vmem:[#allocation8 + $0x150] sm:$0xff]
        %v687 = vld [vmem:[#allocation8 + $0x158] sm:$0xff]
        %v688 = vld [vmem:[#allocation8 + $0x160] sm:$0xff]
        %v689 = vld [vmem:[#allocation8 + $0x168] sm:$0xff]
        %v690 = vld [vmem:[#allocation8 + $0x170] sm:$0xff]
        %v691 = vld [vmem:[#allocation8 + $0x178] sm:$0xff]
        %v692 = vld [vmem:[%s5] sm:$0x7]
        %v694 = vlaneseq
        %v695 = vshrl.u32 %v694, 7
        %v696 = vsub.s32 0, %v695
        %v697 = vrot.slane %v692, %v696
        %v698 = vlaneseq
        %v699 = vshrl.u32 %v698, 7
        %v700 = vsub.s32 1, %v699
        %v701 = vrot.slane %v692, %v700
        %v702 = vlaneseq
        %v703 = vshrl.u32 %v702, 7
        %v704 = vsub.s32 2, %v703
        %v705 = vrot.slane %v692, %v704
        %709 = vmatprep.subr.mxu0 %v645
        %710 = vmatpush1.msra.mxu0 %v644
        %711 = vmatprep.subr.mxu0 %v648
        %712 = vmatpush1.msra.mxu0 %v647
        %713 = vmatprep.subr.mxu0 %v651
        %714 = vmatpush1.msra.mxu0 %v650
        %715 = vmatprep.subr.mxu0 %v654
        %716 = vmatpush1.msra.mxu0 %v653
        %717 = vmatprep.subr.mxu0 %v657
        %718 = vmatpush1.msra.mxu0 %v656
        %719 = vmatprep.subr.mxu0 %v660
        %720 = vmatpush1.msra.mxu0 %v659
        %721 = vmatprep.subr.mxu0 %v663
        %722 = vmatpush1.msra.mxu0 %v662
        %723 = vmatprep.subr.mxu0 %v666
        %724 = vmatpush1.msra.mxu0 %v665
        %725 = vmatprep.subr.mxu0 %v669
        %726 = vmatpush1.msra.mxu0 %v668
        %727 = vmatprep.subr.mxu0 %v672
        %728 = vmatpush1.msra.mxu0 %v671
        %729 = vmatprep.subr.mxu0 %v675
        %730 = vmatpush1.msra.mxu0 %v674
        %731 = vmatprep.subr.mxu0 %v678
        %732 = vmatpush1.msra.mxu0 %v677
        %733 = vmatprep.subr.mxu0 %v681
        %734 = vmatpush1.msra.mxu0 %v680
        %735 = vmatprep.subr.mxu0 %v684
        %736 = vmatpush1.msra.mxu0 %v683
        %737 = vmatprep.subr.mxu0 %v687
        %738 = vmatpush1.msra.mxu0 %v686
        %739 = vmatprep.subr.mxu0 %v690
        %740 = vmatpush1.msra.mxu0 %v689
        %741 = vmatprep.subr.mxu0 0.0
        %742 = vmatpush1.msra.mxu0 0.0
        %743 = vmatprep.subr.mxu0 0.0
        %744 = vmatpush1.msra.mxu0 0.0
        %745 = vmatprep.subr.mxu0 0.0
        %746 = vmatpush1.msra.mxu0 0.0
        %747 = vmatprep.subr.mxu0 0.0
        %748 = vmatpush1.msra.mxu0 0.0
        %749 = vmatprep.subr.mxu0 0.0
        %750 = vmatpush1.msra.mxu0 0.0
        %751 = vmatprep.subr.mxu0 0.0
        %752 = vmatpush1.msra.mxu0 0.0
        %753 = vmatprep.subr.mxu0 0.0
        %754 = vmatpush1.msra.mxu0 0.0
        %755 = vmatprep.subr.mxu0 0.0
        %756 = vmatpush1.msra.mxu0 0.0
        %757 = vmatprep.subr.mxu0 0.0
        %758 = vmatpush1.msra.mxu0 0.0
        %759 = vmatprep.subr.mxu0 0.0
        %760 = vmatpush1.msra.mxu0 0.0
        %761 = vmatprep.subr.mxu0 0.0
        %762 = vmatpush1.msra.mxu0 0.0
        %763 = vmatprep.subr.mxu0 0.0
        %764 = vmatpush1.msra.mxu0 0.0
        %765 = vmatprep.subr.mxu0 0.0
        %766 = vmatpush1.msra.mxu0 0.0
        %767 = vmatprep.subr.mxu0 0.0
        %768 = vmatpush1.msra.mxu0 0.0
        %769 = vmatprep.subr.mxu0 0.0
        %770 = vmatpush1.msra.mxu0 0.0
        %771 = vmatprep.subr.mxu0 0.0
        %772 = vmatpush1.msra.mxu0 0.0
        %773 = vmatprep.mubr.f32.mxu0 0.0
        %774 = vmatmul.mubr.f32.gmra.mrb[0].mxu0 %v643
        %v775 = vpop.f32.mrb[0].mxu0
        %v776 = vadd.f32 %v697, %v775
        %v777 = vpop.f32.mrb[0].mxu0
        %v778 = vadd.f32 %v701, %v777
        %779 = vdwg.mxu0
        %780 = vmatprep.subr.mxu0 0.0
        %781 = vmatpush1.msra.mxu0 %v646
        %782 = vmatprep.subr.mxu0 0.0
        %783 = vmatpush1.msra.mxu0 %v649
        %784 = vmatprep.subr.mxu0 0.0
        %785 = vmatpush1.msra.mxu0 %v652
        %786 = vmatprep.subr.mxu0 0.0
        %787 = vmatpush1.msra.mxu0 %v655
        %788 = vmatprep.subr.mxu0 0.0
        %789 = vmatpush1.msra.mxu0 %v658
        %790 = vmatprep.subr.mxu0 0.0
        %791 = vmatpush1.msra.mxu0 %v661
        %792 = vmatprep.subr.mxu0 0.0
        %793 = vmatpush1.msra.mxu0 %v664
        %794 = vmatprep.subr.mxu0 0.0
        %795 = vmatpush1.msra.mxu0 %v667
        %796 = vmatprep.subr.mxu0 0.0
        %797 = vmatpush1.msra.mxu0 %v670
        %798 = vmatprep.subr.mxu0 0.0
        %799 = vmatpush1.msra.mxu0 %v673
        %800 = vmatprep.subr.mxu0 0.0
        %801 = vmatpush1.msra.mxu0 %v676
        %802 = vmatprep.subr.mxu0 0.0
        %803 = vmatpush1.msra.mxu0 %v679
        %804 = vmatprep.subr.mxu0 0.0
        %805 = vmatpush1.msra.mxu0 %v682
        %806 = vmatprep.subr.mxu0 0.0
        %807 = vmatpush1.msra.mxu0 %v685
        %808 = vmatprep.subr.mxu0 0.0
        %809 = vmatpush1.msra.mxu0 %v688
        %810 = vmatprep.subr.mxu0 0.0
        %811 = vmatpush1.msra.mxu0 %v691
        %812 = vmatprep.subr.mxu0 0.0
        %813 = vmatpush1.msra.mxu0 0.0
        %814 = vmatprep.subr.mxu0 0.0
        %815 = vmatpush1.msra.mxu0 0.0
        %816 = vmatprep.subr.mxu0 0.0
        %817 = vmatpush1.msra.mxu0 0.0
        %818 = vmatprep.subr.mxu0 0.0
        %819 = vmatpush1.msra.mxu0 0.0
        %820 = vmatprep.subr.mxu0 0.0
        %821 = vmatpush1.msra.mxu0 0.0
        %822 = vmatprep.subr.mxu0 0.0
        %823 = vmatpush1.msra.mxu0 0.0
        %824 = vmatprep.subr.mxu0 0.0
        %825 = vmatpush1.msra.mxu0 0.0
        %826 = vmatprep.subr.mxu0 0.0
        %827 = vmatpush1.msra.mxu0 0.0
        %828 = vmatprep.subr.mxu0 0.0
        %829 = vmatpush1.msra.mxu0 0.0
        %830 = vmatprep.subr.mxu0 0.0
        %831 = vmatpush1.msra.mxu0 0.0
        %832 = vmatprep.subr.mxu0 0.0
        %833 = vmatpush1.msra.mxu0 0.0
        %834 = vmatprep.subr.mxu0 0.0
        %835 = vmatpush1.msra.mxu0 0.0
        %836 = vmatprep.subr.mxu0 0.0
        %837 = vmatpush1.msra.mxu0 0.0
        %838 = vmatprep.subr.mxu0 0.0
        %839 = vmatpush1.msra.mxu0 0.0
        %840 = vmatprep.subr.mxu0 0.0
        %841 = vmatpush1.msra.mxu0 0.0
        %842 = vmatprep.subr.mxu0 0.0
        %843 = vmatpush1.msra.mxu0 0.0
        %844 = vmatprep.mubr.f32.mxu0 0.0
        %845 = vmatmul.mubr.f32.gmra.mrb[0].mxu0 %v643
        %v846 = vpop.f32.mrb[0].mxu0
        %v847 = vadd.f32 %v705, %v846
        %v848 = vpop.f32.mrb[0].mxu0
        %849 = vdwg.mxu0
        %v850 = vld [vmem:[#allocation10] sm:$0xff]
        %v851 = vld [vmem:[#allocation10 + $0x8] sm:$0xff]
        %v852 = vld [vmem:[#allocation10 + $0x10] sm:$0xff]
        %v853 = vld [vmem:[#allocation10 + $0x18] sm:$0xff]
        %v854 = vld [vmem:[#allocation10 + $0x20] sm:$0xff]
        %v855 = vld [vmem:[#allocation10 + $0x28] sm:$0xff]
        %v856 = vld [vmem:[#allocation10 + $0x30] sm:$0xff]
        %v857 = vld [vmem:[#allocation10 + $0x38] sm:$0xff]
        %v858 = vld [vmem:[#allocation10 + $0x40] sm:$0xff]
        %v859 = vld [vmem:[#allocation10 + $0x48] sm:$0xff]
        %v860 = vld [vmem:[#allocation10 + $0x50] sm:$0xff]
        %v861 = vld [vmem:[#allocation10 + $0x58] sm:$0xff]
        %v862 = vld [vmem:[#allocation10 + $0x60] sm:$0xff]
        %v863 = vld [vmem:[#allocation10 + $0x68] sm:$0xff]
        %v864 = vld [vmem:[#allocation10 + $0x70] sm:$0xff]
        %v865 = vld [vmem:[#allocation10 + $0x78] sm:$0xff]
        %v866 = vld [vmem:[#allocation10 + $0x80] sm:$0xff]
        %v867 = vld [vmem:[#allocation10 + $0x88] sm:$0xff]
        %v868 = vld [vmem:[#allocation10 + $0x90] sm:$0xff]
        %v869 = vld [vmem:[#allocation10 + $0x98] sm:$0xff]
        %v870 = vld [vmem:[#allocation10 + $0xa0] sm:$0xff]
        %v871 = vld [vmem:[#allocation10 + $0xa8] sm:$0xff]
        %v872 = vld [vmem:[#allocation10 + $0xb0] sm:$0xff]
        %v873 = vld [vmem:[#allocation10 + $0xb8] sm:$0xff]
        %v874 = vld [vmem:[#allocation10 + $0xc0] sm:$0xff]
        %v875 = vld [vmem:[#allocation10 + $0xc8] sm:$0xff]
        %v876 = vld [vmem:[#allocation10 + $0xd0] sm:$0xff]
        %v877 = vld [vmem:[#allocation10 + $0xd8] sm:$0xff]
        %v878 = vld [vmem:[#allocation10 + $0xe0] sm:$0xff]
        %v879 = vld [vmem:[#allocation10 + $0xe8] sm:$0xff]
        %v880 = vld [vmem:[#allocation10 + $0xf0] sm:$0xff]
        %v881 = vld [vmem:[#allocation10 + $0xf8] sm:$0xff]
        %v882 = vld [vmem:[#allocation10 + $0x100] sm:$0xff]
        %v883 = vld [vmem:[#allocation10 + $0x108] sm:$0xff]
        %v884 = vld [vmem:[#allocation10 + $0x110] sm:$0xff]
        %v885 = vld [vmem:[#allocation10 + $0x118] sm:$0xff]
        %v886 = vld [vmem:[#allocation10 + $0x120] sm:$0xff]
        %v887 = vld [vmem:[#allocation10 + $0x128] sm:$0xff]
        %v888 = vld [vmem:[#allocation10 + $0x130] sm:$0xff]
        %v889 = vld [vmem:[#allocation10 + $0x138] sm:$0xff]
        %v890 = vld [vmem:[#allocation10 + $0x140] sm:$0xff]
        %v891 = vld [vmem:[#allocation10 + $0x148] sm:$0xff]
        %v892 = vld [vmem:[#allocation10 + $0x150] sm:$0xff]
        %v893 = vld [vmem:[#allocation10 + $0x158] sm:$0xff]
        %v894 = vld [vmem:[#allocation10 + $0x160] sm:$0xff]
        %v895 = vld [vmem:[#allocation10 + $0x168] sm:$0xff]
        %v896 = vld [vmem:[#allocation10 + $0x170] sm:$0xff]
        %v897 = vld [vmem:[#allocation10 + $0x178] sm:$0xff]
        %v898 = vld [vmem:[%s7] sm:$0x7]
        %v900 = vlaneseq
        %v901 = vshrl.u32 %v900, 7
        %v902 = vsub.s32 0, %v901
        %v903 = vrot.slane %v898, %v902
        %v904 = vlaneseq
        %v905 = vshrl.u32 %v904, 7
        %v906 = vsub.s32 1, %v905
        %v907 = vrot.slane %v898, %v906
        %v908 = vlaneseq
        %v909 = vshrl.u32 %v908, 7
        %v910 = vsub.s32 2, %v909
        %v911 = vrot.slane %v898, %v910
        %915 = vmatprep.subr.mxu0 %v851
        %916 = vmatpush1.msra.mxu0 %v850
        %917 = vmatprep.subr.mxu0 %v854
        %918 = vmatpush1.msra.mxu0 %v853
        %919 = vmatprep.subr.mxu0 %v857
        %920 = vmatpush1.msra.mxu0 %v856
        %921 = vmatprep.subr.mxu0 %v860
        %922 = vmatpush1.msra.mxu0 %v859
        %923 = vmatprep.subr.mxu0 %v863
        %924 = vmatpush1.msra.mxu0 %v862
        %925 = vmatprep.subr.mxu0 %v866
        %926 = vmatpush1.msra.mxu0 %v865
        %927 = vmatprep.subr.mxu0 %v869
        %928 = vmatpush1.msra.mxu0 %v868
        %929 = vmatprep.subr.mxu0 %v872
        %930 = vmatpush1.msra.mxu0 %v871
        %931 = vmatprep.subr.mxu0 %v875
        %932 = vmatpush1.msra.mxu0 %v874
        %933 = vmatprep.subr.mxu0 %v878
        %934 = vmatpush1.msra.mxu0 %v877
        %935 = vmatprep.subr.mxu0 %v881
        %936 = vmatpush1.msra.mxu0 %v880
        %937 = vmatprep.subr.mxu0 %v884
        %938 = vmatpush1.msra.mxu0 %v883
        %939 = vmatprep.subr.mxu0 %v887
        %940 = vmatpush1.msra.mxu0 %v886
        %941 = vmatprep.subr.mxu0 %v890
        %942 = vmatpush1.msra.mxu0 %v889
        %943 = vmatprep.subr.mxu0 %v893
        %944 = vmatpush1.msra.mxu0 %v892
        %945 = vmatprep.subr.mxu0 %v896
        %946 = vmatpush1.msra.mxu0 %v895
        %947 = vmatprep.subr.mxu0 0.0
        %948 = vmatpush1.msra.mxu0 0.0
        %949 = vmatprep.subr.mxu0 0.0
        %950 = vmatpush1.msra.mxu0 0.0
        %951 = vmatprep.subr.mxu0 0.0
        %952 = vmatpush1.msra.mxu0 0.0
        %953 = vmatprep.subr.mxu0 0.0
        %954 = vmatpush1.msra.mxu0 0.0
        %955 = vmatprep.subr.mxu0 0.0
        %956 = vmatpush1.msra.mxu0 0.0
        %957 = vmatprep.subr.mxu0 0.0
        %958 = vmatpush1.msra.mxu0 0.0
        %959 = vmatprep.subr.mxu0 0.0
        %960 = vmatpush1.msra.mxu0 0.0
        %961 = vmatprep.subr.mxu0 0.0
        %962 = vmatpush1.msra.mxu0 0.0
        %963 = vmatprep.subr.mxu0 0.0
        %964 = vmatpush1.msra.mxu0 0.0
        %965 = vmatprep.subr.mxu0 0.0
        %966 = vmatpush1.msra.mxu0 0.0
        %967 = vmatprep.subr.mxu0 0.0
        %968 = vmatpush1.msra.mxu0 0.0
        %969 = vmatprep.subr.mxu0 0.0
        %970 = vmatpush1.msra.mxu0 0.0
        %971 = vmatprep.subr.mxu0 0.0
        %972 = vmatpush1.msra.mxu0 0.0
        %973 = vmatprep.subr.mxu0 0.0
        %974 = vmatpush1.msra.mxu0 0.0
        %975 = vmatprep.subr.mxu0 0.0
        %976 = vmatpush1.msra.mxu0 0.0
        %977 = vmatprep.subr.mxu0 0.0
        %978 = vmatpush1.msra.mxu0 0.0
        %979 = vmatprep.mubr.f32.mxu0 0.0
        %980 = vmatmul.mubr.f32.gmra.mrb[0].mxu0 %v402
        %v981 = vpop.f32.mrb[0].mxu0
        %v982 = vadd.f32 %v903, %v981
        %v983 = vpop.f32.mrb[0].mxu0
        %v984 = vadd.f32 %v907, %v983
        %985 = vdwg.mxu0
        %986 = vmatprep.subr.mxu0 0.0
        %987 = vmatpush1.msra.mxu0 %v852
        %988 = vmatprep.subr.mxu0 0.0
        %989 = vmatpush1.msra.mxu0 %v855
        %990 = vmatprep.subr.mxu0 0.0
        %991 = vmatpush1.msra.mxu0 %v858
        %992 = vmatprep.subr.mxu0 0.0
        %993 = vmatpush1.msra.mxu0 %v861
        %994 = vmatprep.subr.mxu0 0.0
        %995 = vmatpush1.msra.mxu0 %v864
        %996 = vmatprep.subr.mxu0 0.0
        %997 = vmatpush1.msra.mxu0 %v867
        %998 = vmatprep.subr.mxu0 0.0
        %999 = vmatpush1.msra.mxu0 %v870
        %1000 = vmatprep.subr.mxu0 0.0
        %1001 = vmatpush1.msra.mxu0 %v873
        %1002 = vmatprep.subr.mxu0 0.0
        %1003 = vmatpush1.msra.mxu0 %v876
        %1004 = vmatprep.subr.mxu0 0.0
        %1005 = vmatpush1.msra.mxu0 %v879
        %1006 = vmatprep.subr.mxu0 0.0
        %1007 = vmatpush1.msra.mxu0 %v882
        %1008 = vmatprep.subr.mxu0 0.0
        %1009 = vmatpush1.msra.mxu0 %v885
        %1010 = vmatprep.subr.mxu0 0.0
        %1011 = vmatpush1.msra.mxu0 %v888
        %1012 = vmatprep.subr.mxu0 0.0
        %1013 = vmatpush1.msra.mxu0 %v891
        %1014 = vmatprep.subr.mxu0 0.0
        %1015 = vmatpush1.msra.mxu0 %v894
        %1016 = vmatprep.subr.mxu0 0.0
        %1017 = vmatpush1.msra.mxu0 %v897
        %1018 = vmatprep.subr.mxu0 0.0
        %1019 = vmatpush1.msra.mxu0 0.0
        %1020 = vmatprep.subr.mxu0 0.0
        %1021 = vmatpush1.msra.mxu0 0.0
        %1022 = vmatprep.subr.mxu0 0.0
        %1023 = vmatpush1.msra.mxu0 0.0
        %1024 = vmatprep.subr.mxu0 0.0
        %1025 = vmatpush1.msra.mxu0 0.0
        %1026 = vmatprep.subr.mxu0 0.0
        %1027 = vmatpush1.msra.mxu0 0.0
        %1028 = vmatprep.subr.mxu0 0.0
        %1029 = vmatpush1.msra.mxu0 0.0
        %1030 = vmatprep.subr.mxu0 0.0
        %1031 = vmatpush1.msra.mxu0 0.0
        %1032 = vmatprep.subr.mxu0 0.0
        %1033 = vmatpush1.msra.mxu0 0.0
        %1034 = vmatprep.subr.mxu0 0.0
        %1035 = vmatpush1.msra.mxu0 0.0
        %1036 = vmatprep.subr.mxu0 0.0
        %1037 = vmatpush1.msra.mxu0 0.0
        %1038 = vmatprep.subr.mxu0 0.0
        %1039 = vmatpush1.msra.mxu0 0.0
        %1040 = vmatprep.subr.mxu0 0.0
        %1041 = vmatpush1.msra.mxu0 0.0
        %1042 = vmatprep.subr.mxu0 0.0
        %1043 = vmatpush1.msra.mxu0 0.0
        %1044 = vmatprep.subr.mxu0 0.0
        %1045 = vmatpush1.msra.mxu0 0.0
        %1046 = vmatprep.subr.mxu0 0.0
        %1047 = vmatpush1.msra.mxu0 0.0
        %1048 = vmatprep.subr.mxu0 0.0
        %1049 = vmatpush1.msra.mxu0 0.0
        %1050 = vmatprep.mubr.f32.mxu0 0.0
        %1051 = vmatmul.mubr.f32.gmra.mrb[0].mxu0 %v402
        %v1052 = vpop.f32.mrb[0].mxu0
        %v1053 = vadd.f32 %v911, %v1052
        %v1054 = vpop.f32.mrb[0].mxu0
        %1055 = vdwg.mxu0
        %v1056 = vadd.f32 %v776, %v982
        %v1057 = vxor.u32 %v1056, 2147483648
        %v1058 = vmul.f32 %v1057, 1.442695
        %v1059 = vpow.pop %v1058
        %v1060 = vadd.f32 %v1059, 1.0
        %v1061 = vrcp.pop %v1060
        %v1062 = vmul.f32 1.0, %v1061
        %v1063 = vadd.f32 %v778, %v984
        %v1064 = vxor.u32 %v1063, 2147483648
        %v1065 = vmul.f32 %v1064, 1.442695
        %v1066 = vpow.pop %v1065
        %v1067 = vadd.f32 %v1066, 1.0
        %v1068 = vrcp.pop %v1067
        %v1069 = vmul.f32 1.0, %v1068
        %v1070 = vmul.f32 %v1062, %v1053
        %v1071 = vadd.f32 %v847, %v1070
        %v1072 = vtanh.pop %v1071
        %v1073 = vsub.f32 1.0, %v1069
        %v1074 = vmul.f32 %v1073, %v1072
        %v1075 = vmul.f32 %v1069, %v402
        %v1076 = vadd.f32 %v1074, %v1075
        %1077 = vst [vmem:[%s400] sm:$0xff] %v1076
        %s1078 = sand.u32 %s215, 1
        %s1079 = scalar_lea.sflag [#allocation4], %s1078
        %s1080 = sand.u32 %s215, 1
        %s1081 = smul.addr %s1080, 8
        %s1082 = scalar_lea.vmem [#allocation11], %s1081
        // Predicated region
        $region73: #{tpu_custom_call.1} parent=51 // pred_check
          %p1083 = pneg %p225
        $region74: #{tpu_custom_call.1} parent=51 // pred_check_branch
          %1085 = sbr.rel (%p1083) target = $region76
        $region75: #{tpu_custom_call.1} parent=51 // pred_region
          %s1087 = ssub.s32 128, 128
          %1088 = vsyncadd %s1079, %s1087
          %s1089 = smul.addr %s29, 128
          %s1090 = scalar_lea.hbm %s8, %s1089
          %s1092 = sshll.u32 %s1082, 4
          %s1093 = int_to_ptr.vmem [resolvable:$true] %s1092
          %1095 = dma.vmem_to_hbm [thread:$0]  %s1093, 128, %s1090, %s1079
        $region76: #{tpu_custom_call.1} parent=51 // pred_fallthru
          _
      $region52: #{tpu_custom_call.1} parent=5 // pred_fallthru
        _
      %p1096 = scmp.le.s32.totalorder 2, %s24
      // Predicated region
      $region77: #{tpu_custom_call.1} parent=5 // pred_check
        %p1097 = pneg %p1096
      $region78: #{tpu_custom_call.1} parent=5 // pred_check_branch
        %1099 = sbr.rel (%p1097) target = $region80
      $region79: #{tpu_custom_call.1} parent=5 // pred_region
        %s1100 = ssub.s32 %s24, 2
        // Predicated region
        $region81: #{tpu_custom_call.1} parent=79 // pred_check
          %p1101 = pneg %p231
        $region82: #{tpu_custom_call.1} parent=79 // pred_check_branch
          %1103 = sbr.rel (%p1101) target = $region84
        $region83: #{tpu_custom_call.1} parent=79 // pred_region
          %s1104 = sand.u32 %s216, 1
          %s1105 = scalar_lea.sflag [#allocation4], %s1104
          %s1106 = sand.u32 %s216, 1
          %s1107 = smul.addr %s1106, 8
          %s1108 = scalar_lea.vmem [#allocation11], %s1107
          %1109 = dma.done %s1105, 128
        $region84: #{tpu_custom_call.1} parent=79 // pred_fallthru
          _
      $region80: #{tpu_custom_call.1} parent=5 // pred_fallthru
        _
    $region6: #{tpu_custom_call.1} parent=1 // loop_footer
      %s28 = sadd.s32 1, %s24
    $region7: #{tpu_custom_call.1} parent=1 // loop_footer_branch
      %23 = sbr.rel target = $region3
    $region8: #{tpu_custom_call.1} parent=1 // loop_exit
      _
    %1110 = vsyncpa [#allocation3], 1
    %s1111 = scalar_lea.sflag [#allocation3], 1
    %1112 = vsyncpa %s1111, 1
    %1113 = vsyncpa [#allocation6], 1
    %s1114 = scalar_lea.sflag [#allocation6], 1
    %1115 = vsyncpa %s1114, 1
    %1116 = vsyncpa [#allocation9], 1
    %1117 = vsyncpa [#allocation4], 1
    %s1118 = scalar_lea.sflag [#allocation4], 1
    %1119 = vsyncpa %s1118, 1

</llo_original>
